<compile_context>
chip_gen: v7x
topology: tpu7x:2x2x1
jax: 0.10.0
libtpu: 0.0.40
codegen_flags: <defaults>
</compile_context>

<pallas_src>
import math

import jax
import jax.numpy as jnp
from jax.experimental import pallas as pl
from jax.experimental.pallas import tpu as pltpu

# Network dimensions.
N_IN, H1, H2, N_OUT = 4, 9, 6, 1

# Offsets into the flattened parameter vector (weights stored (in, out),
# row-major, so W[k, j] = flat[w_off + k * n_out + j]).
W1_OFF = 0
B1_OFF = W1_OFF + N_IN * H1      # 36
W2_OFF = B1_OFF + H1             # 45
B2_OFF = W2_OFF + H1 * H2        # 99
W3_OFF = B2_OFF + H2             # 105
B3_OFF = W3_OFF + H2 * N_OUT     # 111
N_PARAMS = B3_OFF + N_OUT        # 112


def _round_up(x, m):
    return ((x + m - 1) // m) * m


def dqn_kernel(p_ref, x_ref, o_ref):
    """Fused 3-layer MLP, batch on lanes, weights as SMEM scalars.

    p_ref : SMEM (112,) f32  -- all weights/biases, resident for whole grid
    x_ref : VMEM (4, TB) f32 -- one batch tile, features on sublanes
    o_ref : VMEM (1, TB) f32 -- lane-dense output tile
    """
    x = x_ref[...]                                   # (4, TB)
    rows = [x[k:k + 1, :] for k in range(N_IN)]      # list of (1, TB)

    def dense_sigmoid(rows_in, w_off, b_off, n_in, n_out):
        outs = []
        for j in range(n_out):
            acc = rows_in[0] * p_ref[w_off + j]      # scalar * (1, TB)
            for k in range(1, n_in):
                acc = acc + rows_in[k] * p_ref[w_off + k * n_out + j]
            outs.append(jax.nn.sigmoid(acc + p_ref[b_off + j]))
        return outs

    h1 = dense_sigmoid(rows, W1_OFF, B1_OFF, N_IN, H1)   # 9 x (1, TB)
    h2 = dense_sigmoid(h1, W2_OFF, B2_OFF, H1, H2)       # 6 x (1, TB)
    h3 = dense_sigmoid(h2, W3_OFF, B3_OFF, H2, N_OUT)    # 1 x (1, TB)

    o_ref[...] = h3[0]                                   # lane-dense store


def dqnetwork_forward(x, params, block_rows=8192):
    """x: (B, 4) f32 -> (B, 1) f32. Batch is tiled along the lane axis."""
    w1, b1, w2, b2, w3, b3 = params
    B = x.shape[0]

    # Tile size: multiple of 128 lanes, large to amortize per-step overhead,
    # but never larger than the (128-rounded) batch itself.
    tb = min(block_rows, _round_up(B, 128))
    Bp = _round_up(B, tb)

    # Batch-on-lanes layout: (4, Bp), zero-padded tail columns.
    xt = jnp.zeros((N_IN, Bp), jnp.float32).at[:, :B].set(
        x.astype(jnp.float32).T)

    # All 112 parameters in one flat SMEM-resident vector.
    flat = jnp.concatenate([
        w1.reshape(-1), b1.reshape(-1),
        w2.reshape(-1), b2.reshape(-1),
        w3.reshape(-1), b3.reshape(-1),
    ]).astype(jnp.float32)

    grid = (Bp // tb,)
    flops = 2 * (N_IN * H1 + H1 * H2 + H2 * N_OUT) * Bp
    out = pl.pallas_call(
        dqn_kernel,
        out_shape=jax.ShapeDtypeStruct((1, Bp), jnp.float32),
        grid=grid,
        in_specs=[
            # Parameters: whole (112,) vector in SMEM, resident across grid.
            pl.BlockSpec(memory_space=pltpu.MemorySpace.SMEM),
            # Activations: one (4, TB) batch tile per grid step.
            pl.BlockSpec((N_IN, tb), lambda i: (0, i)),
        ],
        out_specs=pl.BlockSpec((1, tb), lambda i: (0, i)),
        compiler_params=pltpu.CompilerParams(
            dimension_semantics=("parallel",),   # megacore-shard batch axis
            vmem_limit_bytes=64 << 20,
        ),
        cost_estimate=pl.CostEstimate(
            flops=flops,
            transcendentals=(H1 + H2 + N_OUT) * Bp,
            bytes_accessed=(N_IN + N_OUT) * 4 * Bp,
        ),
    )(flat, xt)

    return out[0, :B].reshape(B, 1)


def xavier_uniform(key, fan_in, fan_out):
    """Matches torch.nn.init.xavier_uniform_ (gain=1); stored as (in, out)."""
    limit = math.sqrt(6.0 / (fan_in + fan_out))
    return jax.random.uniform(key, (fan_in, fan_out), jnp.float32,
                              minval=-limit, maxval=limit)


def linear_bias(key, fan_in, fan_out):
    """Matches PyTorch default nn.Linear bias init: U(-1/sqrt(fan_in), +)."""
    bound = 1.0 / math.sqrt(fan_in)
    return jax.random.uniform(key, (fan_out,), jnp.float32,
                              minval=-bound, maxval=bound)


def init_params(key):
    k = jax.random.split(key, 6)
    return (xavier_uniform(k[0], N_IN, H1), linear_bias(k[1], N_IN, H1),
            xavier_uniform(k[2], H1, H2), linear_bias(k[3], H1, H2),
            xavier_uniform(k[4], H2, N_OUT), linear_bias(k[5], H2, N_OUT))


def reference_forward(x, params):
    """Pure-JAX reference for correctness check (== PyTorch forward)."""
    w1, b1, w2, b2, w3, b3 = params
    h = jax.nn.sigmoid(x @ w1 + b1)
    h = jax.nn.sigmoid(h @ w2 + b2)
    return jax.nn.sigmoid(h @ w3 + b3)


if __name__ == "__main__":
    # NOTE: for the real NEAT loop with B=2 per network, a standalone Pallas
    # dispatch is all launch overhead — batch the whole population into one
    # call (this kernel handles arbitrary B) or just use reference_forward.
    key = jax.random.PRNGKey(0)
    pkey, xkey1, xkey2 = jax.random.split(key, 3)
    params = init_params(pkey)

    # Small test consistent with the module: batch=2, state_size=4.
    x_small = jax.random.normal(xkey1, (2, N_IN), jnp.float32)
    out_small = jax.block_until_ready(dqnetwork_forward(x_small, params))
    ref_small = reference_forward(x_small, params)
    assert out_small.shape == (2, 1), out_small.shape
    assert jnp.allclose(out_small, ref_small, atol=1e-5, rtol=1e-5)

    # Multi-tile test: B=300 with 128-row tiles -> grid=(3,), exercises
    # batch tiling, padding, and lane-dense stores.
    x_big = jax.random.normal(xkey2, (300, N_IN), jnp.float32)
    out_big = jax.block_until_ready(
        dqnetwork_forward(x_big, params, block_rows=128))
    ref_big = reference_forward(x_big, params)
    assert out_big.shape == (300, 1), out_big.shape
    assert jnp.allclose(out_big, ref_big, atol=1e-5, rtol=1e-5)

    print("KERNEL_OK")
</pallas_src>

<mosaic_0001>
module attributes {stable_mosaic.version = 11 : i64} {
  func.func @dqn_kernel(%arg0: i32, %arg1: memref<112xf32, #tpu.memory_space<smem>>, %arg2: memref<4x128xf32, #tpu.memory_space<vmem>>, %arg3: memref<1x128xf32, #tpu.memory_space<vmem>>) attributes {dimension_semantics = [#tpu.dimension_semantics<parallel>], iteration_bounds = array<i64: 1>, scalar_prefetch = 0 : i64, scratch_operands = 0 : i64, tpu.core_type = #tpu.core_type<tc>, window_params = [{transform_indices = @transform_0, window_bounds = array<i64: 112>}, {transform_indices = @transform_1, window_bounds = array<i64: 4, 128>}, {transform_indices = @transform_2, window_bounds = array<i64: 1, 128>}]} {
    %c0 = arith.constant 0 : index
    %c0_0 = arith.constant 0 : index
    %0 = vector.load %arg2[%c0, %c0_0] : memref<4x128xf32, #tpu.memory_space<vmem>>, vector<4x128xf32>
    %1 = vector.extract_strided_slice %0 {offsets = [0, 0], sizes = [1, 128], strides = [1, 1]} : vector<4x128xf32> to vector<1x128xf32>
    %2 = vector.extract_strided_slice %0 {offsets = [1, 0], sizes = [1, 128], strides = [1, 1]} : vector<4x128xf32> to vector<1x128xf32>
    %3 = vector.extract_strided_slice %0 {offsets = [2, 0], sizes = [1, 128], strides = [1, 1]} : vector<4x128xf32> to vector<1x128xf32>
    %4 = vector.extract_strided_slice %0 {offsets = [3, 0], sizes = [1, 128], strides = [1, 1]} : vector<4x128xf32> to vector<1x128xf32>
    %c0_1 = arith.constant 0 : index
    %5 = memref.load %arg1[%c0_1] : memref<112xf32, #tpu.memory_space<smem>>
    %6 = vector.broadcast %5 : f32 to vector<1x128xf32>
    %7 = arith.mulf %1, %6 : vector<1x128xf32>
    %c9 = arith.constant 9 : index
    %8 = memref.load %arg1[%c9] : memref<112xf32, #tpu.memory_space<smem>>
    %9 = vector.broadcast %8 : f32 to vector<1x128xf32>
    %10 = arith.mulf %2, %9 : vector<1x128xf32>
    %11 = arith.addf %7, %10 : vector<1x128xf32>
    %c18 = arith.constant 18 : index
    %12 = memref.load %arg1[%c18] : memref<112xf32, #tpu.memory_space<smem>>
    %13 = vector.broadcast %12 : f32 to vector<1x128xf32>
    %14 = arith.mulf %3, %13 : vector<1x128xf32>
    %15 = arith.addf %11, %14 : vector<1x128xf32>
    %c27 = arith.constant 27 : index
    %16 = memref.load %arg1[%c27] : memref<112xf32, #tpu.memory_space<smem>>
    %17 = vector.broadcast %16 : f32 to vector<1x128xf32>
    %18 = arith.mulf %4, %17 : vector<1x128xf32>
    %19 = arith.addf %15, %18 : vector<1x128xf32>
    %c36 = arith.constant 36 : index
    %20 = memref.load %arg1[%c36] : memref<112xf32, #tpu.memory_space<smem>>
    %21 = vector.broadcast %20 : f32 to vector<1x128xf32>
    %22 = arith.addf %19, %21 : vector<1x128xf32>
    %23 = arith.negf %22 : vector<1x128xf32>
    %24 = math.exp %23 : vector<1x128xf32>
    %cst = arith.constant 1.000000e+00 : f32
    %25 = vector.broadcast %cst : f32 to vector<1x128xf32>
    %26 = arith.addf %25, %24 : vector<1x128xf32>
    %27 = arith.divf %25, %26 : vector<1x128xf32>
    %c1 = arith.constant 1 : index
    %28 = memref.load %arg1[%c1] : memref<112xf32, #tpu.memory_space<smem>>
    %29 = vector.broadcast %28 : f32 to vector<1x128xf32>
    %30 = arith.mulf %1, %29 : vector<1x128xf32>
    %c10 = arith.constant 10 : index
    %31 = memref.load %arg1[%c10] : memref<112xf32, #tpu.memory_space<smem>>
    %32 = vector.broadcast %31 : f32 to vector<1x128xf32>
    %33 = arith.mulf %2, %32 : vector<1x128xf32>
    %34 = arith.addf %30, %33 : vector<1x128xf32>
    %c19 = arith.constant 19 : index
    %35 = memref.load %arg1[%c19] : memref<112xf32, #tpu.memory_space<smem>>
    %36 = vector.broadcast %35 : f32 to vector<1x128xf32>
    %37 = arith.mulf %3, %36 : vector<1x128xf32>
    %38 = arith.addf %34, %37 : vector<1x128xf32>
    %c28 = arith.constant 28 : index
    %39 = memref.load %arg1[%c28] : memref<112xf32, #tpu.memory_space<smem>>
    %40 = vector.broadcast %39 : f32 to vector<1x128xf32>
    %41 = arith.mulf %4, %40 : vector<1x128xf32>
    %42 = arith.addf %38, %41 : vector<1x128xf32>
    %c37 = arith.constant 37 : index
    %43 = memref.load %arg1[%c37] : memref<112xf32, #tpu.memory_space<smem>>
    %44 = vector.broadcast %43 : f32 to vector<1x128xf32>
    %45 = arith.addf %42, %44 : vector<1x128xf32>
    %46 = arith.negf %45 : vector<1x128xf32>
    %47 = math.exp %46 : vector<1x128xf32>
    %cst_2 = arith.constant 1.000000e+00 : f32
    %48 = vector.broadcast %cst_2 : f32 to vector<1x128xf32>
    %49 = arith.addf %48, %47 : vector<1x128xf32>
    %50 = arith.divf %48, %49 : vector<1x128xf32>
    %c2 = arith.constant 2 : index
    %51 = memref.load %arg1[%c2] : memref<112xf32, #tpu.memory_space<smem>>
    %52 = vector.broadcast %51 : f32 to vector<1x128xf32>
    %53 = arith.mulf %1, %52 : vector<1x128xf32>
    %c11 = arith.constant 11 : index
    %54 = memref.load %arg1[%c11] : memref<112xf32, #tpu.memory_space<smem>>
    %55 = vector.broadcast %54 : f32 to vector<1x128xf32>
    %56 = arith.mulf %2, %55 : vector<1x128xf32>
    %57 = arith.addf %53, %56 : vector<1x128xf32>
    %c20 = arith.constant 20 : index
    %58 = memref.load %arg1[%c20] : memref<112xf32, #tpu.memory_space<smem>>
    %59 = vector.broadcast %58 : f32 to vector<1x128xf32>
    %60 = arith.mulf %3, %59 : vector<1x128xf32>
    %61 = arith.addf %57, %60 : vector<1x128xf32>
    %c29 = arith.constant 29 : index
    %62 = memref.load %arg1[%c29] : memref<112xf32, #tpu.memory_space<smem>>
    %63 = vector.broadcast %62 : f32 to vector<1x128xf32>
    %64 = arith.mulf %4, %63 : vector<1x128xf32>
    %65 = arith.addf %61, %64 : vector<1x128xf32>
    %c38 = arith.constant 38 : index
    %66 = memref.load %arg1[%c38] : memref<112xf32, #tpu.memory_space<smem>>
    %67 = vector.broadcast %66 : f32 to vector<1x128xf32>
    %68 = arith.addf %65, %67 : vector<1x128xf32>
    %69 = arith.negf %68 : vector<1x128xf32>
    %70 = math.exp %69 : vector<1x128xf32>
    %cst_3 = arith.constant 1.000000e+00 : f32
    %71 = vector.broadcast %cst_3 : f32 to vector<1x128xf32>
    %72 = arith.addf %71, %70 : vector<1x128xf32>
    %73 = arith.divf %71, %72 : vector<1x128xf32>
    %c3 = arith.constant 3 : index
    %74 = memref.load %arg1[%c3] : memref<112xf32, #tpu.memory_space<smem>>
    %75 = vector.broadcast %74 : f32 to vector<1x128xf32>
    %76 = arith.mulf %1, %75 : vector<1x128xf32>
    %c12 = arith.constant 12 : index
    %77 = memref.load %arg1[%c12] : memref<112xf32, #tpu.memory_space<smem>>
    %78 = vector.broadcast %77 : f32 to vector<1x128xf32>
    %79 = arith.mulf %2, %78 : vector<1x128xf32>
    %80 = arith.addf %76, %79 : vector<1x128xf32>
    %c21 = arith.constant 21 : index
    %81 = memref.load %arg1[%c21] : memref<112xf32, #tpu.memory_space<smem>>
    %82 = vector.broadcast %81 : f32 to vector<1x128xf32>
    %83 = arith.mulf %3, %82 : vector<1x128xf32>
    %84 = arith.addf %80, %83 : vector<1x128xf32>
    %c30 = arith.constant 30 : index
    %85 = memref.load %arg1[%c30] : memref<112xf32, #tpu.memory_space<smem>>
    %86 = vector.broadcast %85 : f32 to vector<1x128xf32>
    %87 = arith.mulf %4, %86 : vector<1x128xf32>
    %88 = arith.addf %84, %87 : vector<1x128xf32>
    %c39 = arith.constant 39 : index
    %89 = memref.load %arg1[%c39] : memref<112xf32, #tpu.memory_space<smem>>
    %90 = vector.broadcast %89 : f32 to vector<1x128xf32>
    %91 = arith.addf %88, %90 : vector<1x128xf32>
    %92 = arith.negf %91 : vector<1x128xf32>
    %93 = math.exp %92 : vector<1x128xf32>
    %cst_4 = arith.constant 1.000000e+00 : f32
    %94 = vector.broadcast %cst_4 : f32 to vector<1x128xf32>
    %95 = arith.addf %94, %93 : vector<1x128xf32>
    %96 = arith.divf %94, %95 : vector<1x128xf32>
    %c4 = arith.constant 4 : index
    %97 = memref.load %arg1[%c4] : memref<112xf32, #tpu.memory_space<smem>>
    %98 = vector.broadcast %97 : f32 to vector<1x128xf32>
    %99 = arith.mulf %1, %98 : vector<1x128xf32>
    %c13 = arith.constant 13 : index
    %100 = memref.load %arg1[%c13] : memref<112xf32, #tpu.memory_space<smem>>
    %101 = vector.broadcast %100 : f32 to vector<1x128xf32>
    %102 = arith.mulf %2, %101 : vector<1x128xf32>
    %103 = arith.addf %99, %102 : vector<1x128xf32>
    %c22 = arith.constant 22 : index
    %104 = memref.load %arg1[%c22] : memref<112xf32, #tpu.memory_space<smem>>
    %105 = vector.broadcast %104 : f32 to vector<1x128xf32>
    %106 = arith.mulf %3, %105 : vector<1x128xf32>
    %107 = arith.addf %103, %106 : vector<1x128xf32>
    %c31 = arith.constant 31 : index
    %108 = memref.load %arg1[%c31] : memref<112xf32, #tpu.memory_space<smem>>
    %109 = vector.broadcast %108 : f32 to vector<1x128xf32>
    %110 = arith.mulf %4, %109 : vector<1x128xf32>
    %111 = arith.addf %107, %110 : vector<1x128xf32>
    %c40 = arith.constant 40 : index
    %112 = memref.load %arg1[%c40] : memref<112xf32, #tpu.memory_space<smem>>
    %113 = vector.broadcast %112 : f32 to vector<1x128xf32>
    %114 = arith.addf %111, %113 : vector<1x128xf32>
    %115 = arith.negf %114 : vector<1x128xf32>
    %116 = math.exp %115 : vector<1x128xf32>
    %cst_5 = arith.constant 1.000000e+00 : f32
    %117 = vector.broadcast %cst_5 : f32 to vector<1x128xf32>
    %118 = arith.addf %117, %116 : vector<1x128xf32>
    %119 = arith.divf %117, %118 : vector<1x128xf32>
    %c5 = arith.constant 5 : index
    %120 = memref.load %arg1[%c5] : memref<112xf32, #tpu.memory_space<smem>>
    %121 = vector.broadcast %120 : f32 to vector<1x128xf32>
    %122 = arith.mulf %1, %121 : vector<1x128xf32>
    %c14 = arith.constant 14 : index
    %123 = memref.load %arg1[%c14] : memref<112xf32, #tpu.memory_space<smem>>
    %124 = vector.broadcast %123 : f32 to vector<1x128xf32>
    %125 = arith.mulf %2, %124 : vector<1x128xf32>
    %126 = arith.addf %122, %125 : vector<1x128xf32>
    %c23 = arith.constant 23 : index
    %127 = memref.load %arg1[%c23] : memref<112xf32, #tpu.memory_space<smem>>
    %128 = vector.broadcast %127 : f32 to vector<1x128xf32>
    %129 = arith.mulf %3, %128 : vector<1x128xf32>
    %130 = arith.addf %126, %129 : vector<1x128xf32>
    %c32 = arith.constant 32 : index
    %131 = memref.load %arg1[%c32] : memref<112xf32, #tpu.memory_space<smem>>
    %132 = vector.broadcast %131 : f32 to vector<1x128xf32>
    %133 = arith.mulf %4, %132 : vector<1x128xf32>
    %134 = arith.addf %130, %133 : vector<1x128xf32>
    %c41 = arith.constant 41 : index
    %135 = memref.load %arg1[%c41] : memref<112xf32, #tpu.memory_space<smem>>
    %136 = vector.broadcast %135 : f32 to vector<1x128xf32>
    %137 = arith.addf %134, %136 : vector<1x128xf32>
    %138 = arith.negf %137 : vector<1x128xf32>
    %139 = math.exp %138 : vector<1x128xf32>
    %cst_6 = arith.constant 1.000000e+00 : f32
    %140 = vector.broadcast %cst_6 : f32 to vector<1x128xf32>
    %141 = arith.addf %140, %139 : vector<1x128xf32>
    %142 = arith.divf %140, %141 : vector<1x128xf32>
    %c6 = arith.constant 6 : index
    %143 = memref.load %arg1[%c6] : memref<112xf32, #tpu.memory_space<smem>>
    %144 = vector.broadcast %143 : f32 to vector<1x128xf32>
    %145 = arith.mulf %1, %144 : vector<1x128xf32>
    %c15 = arith.constant 15 : index
    %146 = memref.load %arg1[%c15] : memref<112xf32, #tpu.memory_space<smem>>
    %147 = vector.broadcast %146 : f32 to vector<1x128xf32>
    %148 = arith.mulf %2, %147 : vector<1x128xf32>
    %149 = arith.addf %145, %148 : vector<1x128xf32>
    %c24 = arith.constant 24 : index
    %150 = memref.load %arg1[%c24] : memref<112xf32, #tpu.memory_space<smem>>
    %151 = vector.broadcast %150 : f32 to vector<1x128xf32>
    %152 = arith.mulf %3, %151 : vector<1x128xf32>
    %153 = arith.addf %149, %152 : vector<1x128xf32>
    %c33 = arith.constant 33 : index
    %154 = memref.load %arg1[%c33] : memref<112xf32, #tpu.memory_space<smem>>
    %155 = vector.broadcast %154 : f32 to vector<1x128xf32>
    %156 = arith.mulf %4, %155 : vector<1x128xf32>
    %157 = arith.addf %153, %156 : vector<1x128xf32>
    %c42 = arith.constant 42 : index
    %158 = memref.load %arg1[%c42] : memref<112xf32, #tpu.memory_space<smem>>
    %159 = vector.broadcast %158 : f32 to vector<1x128xf32>
    %160 = arith.addf %157, %159 : vector<1x128xf32>
    %161 = arith.negf %160 : vector<1x128xf32>
    %162 = math.exp %161 : vector<1x128xf32>
    %cst_7 = arith.constant 1.000000e+00 : f32
    %163 = vector.broadcast %cst_7 : f32 to vector<1x128xf32>
    %164 = arith.addf %163, %162 : vector<1x128xf32>
    %165 = arith.divf %163, %164 : vector<1x128xf32>
    %c7 = arith.constant 7 : index
    %166 = memref.load %arg1[%c7] : memref<112xf32, #tpu.memory_space<smem>>
    %167 = vector.broadcast %166 : f32 to vector<1x128xf32>
    %168 = arith.mulf %1, %167 : vector<1x128xf32>
    %c16 = arith.constant 16 : index
    %169 = memref.load %arg1[%c16] : memref<112xf32, #tpu.memory_space<smem>>
    %170 = vector.broadcast %169 : f32 to vector<1x128xf32>
    %171 = arith.mulf %2, %170 : vector<1x128xf32>
    %172 = arith.addf %168, %171 : vector<1x128xf32>
    %c25 = arith.constant 25 : index
    %173 = memref.load %arg1[%c25] : memref<112xf32, #tpu.memory_space<smem>>
    %174 = vector.broadcast %173 : f32 to vector<1x128xf32>
    %175 = arith.mulf %3, %174 : vector<1x128xf32>
    %176 = arith.addf %172, %175 : vector<1x128xf32>
    %c34 = arith.constant 34 : index
    %177 = memref.load %arg1[%c34] : memref<112xf32, #tpu.memory_space<smem>>
    %178 = vector.broadcast %177 : f32 to vector<1x128xf32>
    %179 = arith.mulf %4, %178 : vector<1x128xf32>
    %180 = arith.addf %176, %179 : vector<1x128xf32>
    %c43 = arith.constant 43 : index
    %181 = memref.load %arg1[%c43] : memref<112xf32, #tpu.memory_space<smem>>
    %182 = vector.broadcast %181 : f32 to vector<1x128xf32>
    %183 = arith.addf %180, %182 : vector<1x128xf32>
    %184 = arith.negf %183 : vector<1x128xf32>
    %185 = math.exp %184 : vector<1x128xf32>
    %cst_8 = arith.constant 1.000000e+00 : f32
    %186 = vector.broadcast %cst_8 : f32 to vector<1x128xf32>
    %187 = arith.addf %186, %185 : vector<1x128xf32>
    %188 = arith.divf %186, %187 : vector<1x128xf32>
    %c8 = arith.constant 8 : index
    %189 = memref.load %arg1[%c8] : memref<112xf32, #tpu.memory_space<smem>>
    %190 = vector.broadcast %189 : f32 to vector<1x128xf32>
    %191 = arith.mulf %1, %190 : vector<1x128xf32>
    %c17 = arith.constant 17 : index
    %192 = memref.load %arg1[%c17] : memref<112xf32, #tpu.memory_space<smem>>
    %193 = vector.broadcast %192 : f32 to vector<1x128xf32>
    %194 = arith.mulf %2, %193 : vector<1x128xf32>
    %195 = arith.addf %191, %194 : vector<1x128xf32>
    %c26 = arith.constant 26 : index
    %196 = memref.load %arg1[%c26] : memref<112xf32, #tpu.memory_space<smem>>
    %197 = vector.broadcast %196 : f32 to vector<1x128xf32>
    %198 = arith.mulf %3, %197 : vector<1x128xf32>
    %199 = arith.addf %195, %198 : vector<1x128xf32>
    %c35 = arith.constant 35 : index
    %200 = memref.load %arg1[%c35] : memref<112xf32, #tpu.memory_space<smem>>
    %201 = vector.broadcast %200 : f32 to vector<1x128xf32>
    %202 = arith.mulf %4, %201 : vector<1x128xf32>
    %203 = arith.addf %199, %202 : vector<1x128xf32>
    %c44 = arith.constant 44 : index
    %204 = memref.load %arg1[%c44] : memref<112xf32, #tpu.memory_space<smem>>
    %205 = vector.broadcast %204 : f32 to vector<1x128xf32>
    %206 = arith.addf %203, %205 : vector<1x128xf32>
    %207 = arith.negf %206 : vector<1x128xf32>
    %208 = math.exp %207 : vector<1x128xf32>
    %cst_9 = arith.constant 1.000000e+00 : f32
    %209 = vector.broadcast %cst_9 : f32 to vector<1x128xf32>
    %210 = arith.addf %209, %208 : vector<1x128xf32>
    %211 = arith.divf %209, %210 : vector<1x128xf32>
    %c45 = arith.constant 45 : index
    %212 = memref.load %arg1[%c45] : memref<112xf32, #tpu.memory_space<smem>>
    %213 = vector.broadcast %212 : f32 to vector<1x128xf32>
    %214 = arith.mulf %27, %213 : vector<1x128xf32>
    %c51 = arith.constant 51 : index
    %215 = memref.load %arg1[%c51] : memref<112xf32, #tpu.memory_space<smem>>
    %216 = vector.broadcast %215 : f32 to vector<1x128xf32>
    %217 = arith.mulf %50, %216 : vector<1x128xf32>
    %218 = arith.addf %214, %217 : vector<1x128xf32>
    %c57 = arith.constant 57 : index
    %219 = memref.load %arg1[%c57] : memref<112xf32, #tpu.memory_space<smem>>
    %220 = vector.broadcast %219 : f32 to vector<1x128xf32>
    %221 = arith.mulf %73, %220 : vector<1x128xf32>
    %222 = arith.addf %218, %221 : vector<1x128xf32>
    %c63 = arith.constant 63 : index
    %223 = memref.load %arg1[%c63] : memref<112xf32, #tpu.memory_space<smem>>
    %224 = vector.broadcast %223 : f32 to vector<1x128xf32>
    %225 = arith.mulf %96, %224 : vector<1x128xf32>
    %226 = arith.addf %222, %225 : vector<1x128xf32>
    %c69 = arith.constant 69 : index
    %227 = memref.load %arg1[%c69] : memref<112xf32, #tpu.memory_space<smem>>
    %228 = vector.broadcast %227 : f32 to vector<1x128xf32>
    %229 = arith.mulf %119, %228 : vector<1x128xf32>
    %230 = arith.addf %226, %229 : vector<1x128xf32>
    %c75 = arith.constant 75 : index
    %231 = memref.load %arg1[%c75] : memref<112xf32, #tpu.memory_space<smem>>
    %232 = vector.broadcast %231 : f32 to vector<1x128xf32>
    %233 = arith.mulf %142, %232 : vector<1x128xf32>
    %234 = arith.addf %230, %233 : vector<1x128xf32>
    %c81 = arith.constant 81 : index
    %235 = memref.load %arg1[%c81] : memref<112xf32, #tpu.memory_space<smem>>
    %236 = vector.broadcast %235 : f32 to vector<1x128xf32>
    %237 = arith.mulf %165, %236 : vector<1x128xf32>
    %238 = arith.addf %234, %237 : vector<1x128xf32>
    %c87 = arith.constant 87 : index
    %239 = memref.load %arg1[%c87] : memref<112xf32, #tpu.memory_space<smem>>
    %240 = vector.broadcast %239 : f32 to vector<1x128xf32>
    %241 = arith.mulf %188, %240 : vector<1x128xf32>
    %242 = arith.addf %238, %241 : vector<1x128xf32>
    %c93 = arith.constant 93 : index
    %243 = memref.load %arg1[%c93] : memref<112xf32, #tpu.memory_space<smem>>
    %244 = vector.broadcast %243 : f32 to vector<1x128xf32>
    %245 = arith.mulf %211, %244 : vector<1x128xf32>
    %246 = arith.addf %242, %245 : vector<1x128xf32>
    %c99 = arith.constant 99 : index
    %247 = memref.load %arg1[%c99] : memref<112xf32, #tpu.memory_space<smem>>
    %248 = vector.broadcast %247 : f32 to vector<1x128xf32>
    %249 = arith.addf %246, %248 : vector<1x128xf32>
    %250 = arith.negf %249 : vector<1x128xf32>
    %251 = math.exp %250 : vector<1x128xf32>
    %cst_10 = arith.constant 1.000000e+00 : f32
    %252 = vector.broadcast %cst_10 : f32 to vector<1x128xf32>
    %253 = arith.addf %252, %251 : vector<1x128xf32>
    %254 = arith.divf %252, %253 : vector<1x128xf32>
    %c46 = arith.constant 46 : index
    %255 = memref.load %arg1[%c46] : memref<112xf32, #tpu.memory_space<smem>>
    %256 = vector.broadcast %255 : f32 to vector<1x128xf32>
    %257 = arith.mulf %27, %256 : vector<1x128xf32>
    %c52 = arith.constant 52 : index
    %258 = memref.load %arg1[%c52] : memref<112xf32, #tpu.memory_space<smem>>
    %259 = vector.broadcast %258 : f32 to vector<1x128xf32>
    %260 = arith.mulf %50, %259 : vector<1x128xf32>
    %261 = arith.addf %257, %260 : vector<1x128xf32>
    %c58 = arith.constant 58 : index
    %262 = memref.load %arg1[%c58] : memref<112xf32, #tpu.memory_space<smem>>
    %263 = vector.broadcast %262 : f32 to vector<1x128xf32>
    %264 = arith.mulf %73, %263 : vector<1x128xf32>
    %265 = arith.addf %261, %264 : vector<1x128xf32>
    %c64 = arith.constant 64 : index
    %266 = memref.load %arg1[%c64] : memref<112xf32, #tpu.memory_space<smem>>
    %267 = vector.broadcast %266 : f32 to vector<1x128xf32>
    %268 = arith.mulf %96, %267 : vector<1x128xf32>
    %269 = arith.addf %265, %268 : vector<1x128xf32>
    %c70 = arith.constant 70 : index
    %270 = memref.load %arg1[%c70] : memref<112xf32, #tpu.memory_space<smem>>
    %271 = vector.broadcast %270 : f32 to vector<1x128xf32>
    %272 = arith.mulf %119, %271 : vector<1x128xf32>
    %273 = arith.addf %269, %272 : vector<1x128xf32>
    %c76 = arith.constant 76 : index
    %274 = memref.load %arg1[%c76] : memref<112xf32, #tpu.memory_space<smem>>
    %275 = vector.broadcast %274 : f32 to vector<1x128xf32>
    %276 = arith.mulf %142, %275 : vector<1x128xf32>
    %277 = arith.addf %273, %276 : vector<1x128xf32>
    %c82 = arith.constant 82 : index
    %278 = memref.load %arg1[%c82] : memref<112xf32, #tpu.memory_space<smem>>
    %279 = vector.broadcast %278 : f32 to vector<1x128xf32>
    %280 = arith.mulf %165, %279 : vector<1x128xf32>
    %281 = arith.addf %277, %280 : vector<1x128xf32>
    %c88 = arith.constant 88 : index
    %282 = memref.load %arg1[%c88] : memref<112xf32, #tpu.memory_space<smem>>
    %283 = vector.broadcast %282 : f32 to vector<1x128xf32>
    %284 = arith.mulf %188, %283 : vector<1x128xf32>
    %285 = arith.addf %281, %284 : vector<1x128xf32>
    %c94 = arith.constant 94 : index
    %286 = memref.load %arg1[%c94] : memref<112xf32, #tpu.memory_space<smem>>
    %287 = vector.broadcast %286 : f32 to vector<1x128xf32>
    %288 = arith.mulf %211, %287 : vector<1x128xf32>
    %289 = arith.addf %285, %288 : vector<1x128xf32>
    %c100 = arith.constant 100 : index
    %290 = memref.load %arg1[%c100] : memref<112xf32, #tpu.memory_space<smem>>
    %291 = vector.broadcast %290 : f32 to vector<1x128xf32>
    %292 = arith.addf %289, %291 : vector<1x128xf32>
    %293 = arith.negf %292 : vector<1x128xf32>
    %294 = math.exp %293 : vector<1x128xf32>
    %cst_11 = arith.constant 1.000000e+00 : f32
    %295 = vector.broadcast %cst_11 : f32 to vector<1x128xf32>
    %296 = arith.addf %295, %294 : vector<1x128xf32>
    %297 = arith.divf %295, %296 : vector<1x128xf32>
    %c47 = arith.constant 47 : index
    %298 = memref.load %arg1[%c47] : memref<112xf32, #tpu.memory_space<smem>>
    %299 = vector.broadcast %298 : f32 to vector<1x128xf32>
    %300 = arith.mulf %27, %299 : vector<1x128xf32>
    %c53 = arith.constant 53 : index
    %301 = memref.load %arg1[%c53] : memref<112xf32, #tpu.memory_space<smem>>
    %302 = vector.broadcast %301 : f32 to vector<1x128xf32>
    %303 = arith.mulf %50, %302 : vector<1x128xf32>
    %304 = arith.addf %300, %303 : vector<1x128xf32>
    %c59 = arith.constant 59 : index
    %305 = memref.load %arg1[%c59] : memref<112xf32, #tpu.memory_space<smem>>
    %306 = vector.broadcast %305 : f32 to vector<1x128xf32>
    %307 = arith.mulf %73, %306 : vector<1x128xf32>
    %308 = arith.addf %304, %307 : vector<1x128xf32>
    %c65 = arith.constant 65 : index
    %309 = memref.load %arg1[%c65] : memref<112xf32, #tpu.memory_space<smem>>
    %310 = vector.broadcast %309 : f32 to vector<1x128xf32>
    %311 = arith.mulf %96, %310 : vector<1x128xf32>
    %312 = arith.addf %308, %311 : vector<1x128xf32>
    %c71 = arith.constant 71 : index
    %313 = memref.load %arg1[%c71] : memref<112xf32, #tpu.memory_space<smem>>
    %314 = vector.broadcast %313 : f32 to vector<1x128xf32>
    %315 = arith.mulf %119, %314 : vector<1x128xf32>
    %316 = arith.addf %312, %315 : vector<1x128xf32>
    %c77 = arith.constant 77 : index
    %317 = memref.load %arg1[%c77] : memref<112xf32, #tpu.memory_space<smem>>
    %318 = vector.broadcast %317 : f32 to vector<1x128xf32>
    %319 = arith.mulf %142, %318 : vector<1x128xf32>
    %320 = arith.addf %316, %319 : vector<1x128xf32>
    %c83 = arith.constant 83 : index
    %321 = memref.load %arg1[%c83] : memref<112xf32, #tpu.memory_space<smem>>
    %322 = vector.broadcast %321 : f32 to vector<1x128xf32>
    %323 = arith.mulf %165, %322 : vector<1x128xf32>
    %324 = arith.addf %320, %323 : vector<1x128xf32>
    %c89 = arith.constant 89 : index
    %325 = memref.load %arg1[%c89] : memref<112xf32, #tpu.memory_space<smem>>
    %326 = vector.broadcast %325 : f32 to vector<1x128xf32>
    %327 = arith.mulf %188, %326 : vector<1x128xf32>
    %328 = arith.addf %324, %327 : vector<1x128xf32>
    %c95 = arith.constant 95 : index
    %329 = memref.load %arg1[%c95] : memref<112xf32, #tpu.memory_space<smem>>
    %330 = vector.broadcast %329 : f32 to vector<1x128xf32>
    %331 = arith.mulf %211, %330 : vector<1x128xf32>
    %332 = arith.addf %328, %331 : vector<1x128xf32>
    %c101 = arith.constant 101 : index
    %333 = memref.load %arg1[%c101] : memref<112xf32, #tpu.memory_space<smem>>
    %334 = vector.broadcast %333 : f32 to vector<1x128xf32>
    %335 = arith.addf %332, %334 : vector<1x128xf32>
    %336 = arith.negf %335 : vector<1x128xf32>
    %337 = math.exp %336 : vector<1x128xf32>
    %cst_12 = arith.constant 1.000000e+00 : f32
    %338 = vector.broadcast %cst_12 : f32 to vector<1x128xf32>
    %339 = arith.addf %338, %337 : vector<1x128xf32>
    %340 = arith.divf %338, %339 : vector<1x128xf32>
    %c48 = arith.constant 48 : index
    %341 = memref.load %arg1[%c48] : memref<112xf32, #tpu.memory_space<smem>>
    %342 = vector.broadcast %341 : f32 to vector<1x128xf32>
    %343 = arith.mulf %27, %342 : vector<1x128xf32>
    %c54 = arith.constant 54 : index
    %344 = memref.load %arg1[%c54] : memref<112xf32, #tpu.memory_space<smem>>
    %345 = vector.broadcast %344 : f32 to vector<1x128xf32>
    %346 = arith.mulf %50, %345 : vector<1x128xf32>
    %347 = arith.addf %343, %346 : vector<1x128xf32>
    %c60 = arith.constant 60 : index
    %348 = memref.load %arg1[%c60] : memref<112xf32, #tpu.memory_space<smem>>
    %349 = vector.broadcast %348 : f32 to vector<1x128xf32>
    %350 = arith.mulf %73, %349 : vector<1x128xf32>
    %351 = arith.addf %347, %350 : vector<1x128xf32>
    %c66 = arith.constant 66 : index
    %352 = memref.load %arg1[%c66] : memref<112xf32, #tpu.memory_space<smem>>
    %353 = vector.broadcast %352 : f32 to vector<1x128xf32>
    %354 = arith.mulf %96, %353 : vector<1x128xf32>
    %355 = arith.addf %351, %354 : vector<1x128xf32>
    %c72 = arith.constant 72 : index
    %356 = memref.load %arg1[%c72] : memref<112xf32, #tpu.memory_space<smem>>
    %357 = vector.broadcast %356 : f32 to vector<1x128xf32>
    %358 = arith.mulf %119, %357 : vector<1x128xf32>
    %359 = arith.addf %355, %358 : vector<1x128xf32>
    %c78 = arith.constant 78 : index
    %360 = memref.load %arg1[%c78] : memref<112xf32, #tpu.memory_space<smem>>
    %361 = vector.broadcast %360 : f32 to vector<1x128xf32>
    %362 = arith.mulf %142, %361 : vector<1x128xf32>
    %363 = arith.addf %359, %362 : vector<1x128xf32>
    %c84 = arith.constant 84 : index
    %364 = memref.load %arg1[%c84] : memref<112xf32, #tpu.memory_space<smem>>
    %365 = vector.broadcast %364 : f32 to vector<1x128xf32>
    %366 = arith.mulf %165, %365 : vector<1x128xf32>
    %367 = arith.addf %363, %366 : vector<1x128xf32>
    %c90 = arith.constant 90 : index
    %368 = memref.load %arg1[%c90] : memref<112xf32, #tpu.memory_space<smem>>
    %369 = vector.broadcast %368 : f32 to vector<1x128xf32>
    %370 = arith.mulf %188, %369 : vector<1x128xf32>
    %371 = arith.addf %367, %370 : vector<1x128xf32>
    %c96 = arith.constant 96 : index
    %372 = memref.load %arg1[%c96] : memref<112xf32, #tpu.memory_space<smem>>
    %373 = vector.broadcast %372 : f32 to vector<1x128xf32>
    %374 = arith.mulf %211, %373 : vector<1x128xf32>
    %375 = arith.addf %371, %374 : vector<1x128xf32>
    %c102 = arith.constant 102 : index
    %376 = memref.load %arg1[%c102] : memref<112xf32, #tpu.memory_space<smem>>
    %377 = vector.broadcast %376 : f32 to vector<1x128xf32>
    %378 = arith.addf %375, %377 : vector<1x128xf32>
    %379 = arith.negf %378 : vector<1x128xf32>
    %380 = math.exp %379 : vector<1x128xf32>
    %cst_13 = arith.constant 1.000000e+00 : f32
    %381 = vector.broadcast %cst_13 : f32 to vector<1x128xf32>
    %382 = arith.addf %381, %380 : vector<1x128xf32>
    %383 = arith.divf %381, %382 : vector<1x128xf32>
    %c49 = arith.constant 49 : index
    %384 = memref.load %arg1[%c49] : memref<112xf32, #tpu.memory_space<smem>>
    %385 = vector.broadcast %384 : f32 to vector<1x128xf32>
    %386 = arith.mulf %27, %385 : vector<1x128xf32>
    %c55 = arith.constant 55 : index
    %387 = memref.load %arg1[%c55] : memref<112xf32, #tpu.memory_space<smem>>
    %388 = vector.broadcast %387 : f32 to vector<1x128xf32>
    %389 = arith.mulf %50, %388 : vector<1x128xf32>
    %390 = arith.addf %386, %389 : vector<1x128xf32>
    %c61 = arith.constant 61 : index
    %391 = memref.load %arg1[%c61] : memref<112xf32, #tpu.memory_space<smem>>
    %392 = vector.broadcast %391 : f32 to vector<1x128xf32>
    %393 = arith.mulf %73, %392 : vector<1x128xf32>
    %394 = arith.addf %390, %393 : vector<1x128xf32>
    %c67 = arith.constant 67 : index
    %395 = memref.load %arg1[%c67] : memref<112xf32, #tpu.memory_space<smem>>
    %396 = vector.broadcast %395 : f32 to vector<1x128xf32>
    %397 = arith.mulf %96, %396 : vector<1x128xf32>
    %398 = arith.addf %394, %397 : vector<1x128xf32>
    %c73 = arith.constant 73 : index
    %399 = memref.load %arg1[%c73] : memref<112xf32, #tpu.memory_space<smem>>
    %400 = vector.broadcast %399 : f32 to vector<1x128xf32>
    %401 = arith.mulf %119, %400 : vector<1x128xf32>
    %402 = arith.addf %398, %401 : vector<1x128xf32>
    %c79 = arith.constant 79 : index
    %403 = memref.load %arg1[%c79] : memref<112xf32, #tpu.memory_space<smem>>
    %404 = vector.broadcast %403 : f32 to vector<1x128xf32>
    %405 = arith.mulf %142, %404 : vector<1x128xf32>
    %406 = arith.addf %402, %405 : vector<1x128xf32>
    %c85 = arith.constant 85 : index
    %407 = memref.load %arg1[%c85] : memref<112xf32, #tpu.memory_space<smem>>
    %408 = vector.broadcast %407 : f32 to vector<1x128xf32>
    %409 = arith.mulf %165, %408 : vector<1x128xf32>
    %410 = arith.addf %406, %409 : vector<1x128xf32>
    %c91 = arith.constant 91 : index
    %411 = memref.load %arg1[%c91] : memref<112xf32, #tpu.memory_space<smem>>
    %412 = vector.broadcast %411 : f32 to vector<1x128xf32>
    %413 = arith.mulf %188, %412 : vector<1x128xf32>
    %414 = arith.addf %410, %413 : vector<1x128xf32>
    %c97 = arith.constant 97 : index
    %415 = memref.load %arg1[%c97] : memref<112xf32, #tpu.memory_space<smem>>
    %416 = vector.broadcast %415 : f32 to vector<1x128xf32>
    %417 = arith.mulf %211, %416 : vector<1x128xf32>
    %418 = arith.addf %414, %417 : vector<1x128xf32>
    %c103 = arith.constant 103 : index
    %419 = memref.load %arg1[%c103] : memref<112xf32, #tpu.memory_space<smem>>
    %420 = vector.broadcast %419 : f32 to vector<1x128xf32>
    %421 = arith.addf %418, %420 : vector<1x128xf32>
    %422 = arith.negf %421 : vector<1x128xf32>
    %423 = math.exp %422 : vector<1x128xf32>
    %cst_14 = arith.constant 1.000000e+00 : f32
    %424 = vector.broadcast %cst_14 : f32 to vector<1x128xf32>
    %425 = arith.addf %424, %423 : vector<1x128xf32>
    %426 = arith.divf %424, %425 : vector<1x128xf32>
    %c50 = arith.constant 50 : index
    %427 = memref.load %arg1[%c50] : memref<112xf32, #tpu.memory_space<smem>>
    %428 = vector.broadcast %427 : f32 to vector<1x128xf32>
    %429 = arith.mulf %27, %428 : vector<1x128xf32>
    %c56 = arith.constant 56 : index
    %430 = memref.load %arg1[%c56] : memref<112xf32, #tpu.memory_space<smem>>
    %431 = vector.broadcast %430 : f32 to vector<1x128xf32>
    %432 = arith.mulf %50, %431 : vector<1x128xf32>
    %433 = arith.addf %429, %432 : vector<1x128xf32>
    %c62 = arith.constant 62 : index
    %434 = memref.load %arg1[%c62] : memref<112xf32, #tpu.memory_space<smem>>
    %435 = vector.broadcast %434 : f32 to vector<1x128xf32>
    %436 = arith.mulf %73, %435 : vector<1x128xf32>
    %437 = arith.addf %433, %436 : vector<1x128xf32>
    %c68 = arith.constant 68 : index
    %438 = memref.load %arg1[%c68] : memref<112xf32, #tpu.memory_space<smem>>
    %439 = vector.broadcast %438 : f32 to vector<1x128xf32>
    %440 = arith.mulf %96, %439 : vector<1x128xf32>
    %441 = arith.addf %437, %440 : vector<1x128xf32>
    %c74 = arith.constant 74 : index
    %442 = memref.load %arg1[%c74] : memref<112xf32, #tpu.memory_space<smem>>
    %443 = vector.broadcast %442 : f32 to vector<1x128xf32>
    %444 = arith.mulf %119, %443 : vector<1x128xf32>
    %445 = arith.addf %441, %444 : vector<1x128xf32>
    %c80 = arith.constant 80 : index
    %446 = memref.load %arg1[%c80] : memref<112xf32, #tpu.memory_space<smem>>
    %447 = vector.broadcast %446 : f32 to vector<1x128xf32>
    %448 = arith.mulf %142, %447 : vector<1x128xf32>
    %449 = arith.addf %445, %448 : vector<1x128xf32>
    %c86 = arith.constant 86 : index
    %450 = memref.load %arg1[%c86] : memref<112xf32, #tpu.memory_space<smem>>
    %451 = vector.broadcast %450 : f32 to vector<1x128xf32>
    %452 = arith.mulf %165, %451 : vector<1x128xf32>
    %453 = arith.addf %449, %452 : vector<1x128xf32>
    %c92 = arith.constant 92 : index
    %454 = memref.load %arg1[%c92] : memref<112xf32, #tpu.memory_space<smem>>
    %455 = vector.broadcast %454 : f32 to vector<1x128xf32>
    %456 = arith.mulf %188, %455 : vector<1x128xf32>
    %457 = arith.addf %453, %456 : vector<1x128xf32>
    %c98 = arith.constant 98 : index
    %458 = memref.load %arg1[%c98] : memref<112xf32, #tpu.memory_space<smem>>
    %459 = vector.broadcast %458 : f32 to vector<1x128xf32>
    %460 = arith.mulf %211, %459 : vector<1x128xf32>
    %461 = arith.addf %457, %460 : vector<1x128xf32>
    %c104 = arith.constant 104 : index
    %462 = memref.load %arg1[%c104] : memref<112xf32, #tpu.memory_space<smem>>
    %463 = vector.broadcast %462 : f32 to vector<1x128xf32>
    %464 = arith.addf %461, %463 : vector<1x128xf32>
    %465 = arith.negf %464 : vector<1x128xf32>
    %466 = math.exp %465 : vector<1x128xf32>
    %cst_15 = arith.constant 1.000000e+00 : f32
    %467 = vector.broadcast %cst_15 : f32 to vector<1x128xf32>
    %468 = arith.addf %467, %466 : vector<1x128xf32>
    %469 = arith.divf %467, %468 : vector<1x128xf32>
    %c105 = arith.constant 105 : index
    %470 = memref.load %arg1[%c105] : memref<112xf32, #tpu.memory_space<smem>>
    %471 = vector.broadcast %470 : f32 to vector<1x128xf32>
    %472 = arith.mulf %254, %471 : vector<1x128xf32>
    %c106 = arith.constant 106 : index
    %473 = memref.load %arg1[%c106] : memref<112xf32, #tpu.memory_space<smem>>
    %474 = vector.broadcast %473 : f32 to vector<1x128xf32>
    %475 = arith.mulf %297, %474 : vector<1x128xf32>
    %476 = arith.addf %472, %475 : vector<1x128xf32>
    %c107 = arith.constant 107 : index
    %477 = memref.load %arg1[%c107] : memref<112xf32, #tpu.memory_space<smem>>
    %478 = vector.broadcast %477 : f32 to vector<1x128xf32>
    %479 = arith.mulf %340, %478 : vector<1x128xf32>
    %480 = arith.addf %476, %479 : vector<1x128xf32>
    %c108 = arith.constant 108 : index
    %481 = memref.load %arg1[%c108] : memref<112xf32, #tpu.memory_space<smem>>
    %482 = vector.broadcast %481 : f32 to vector<1x128xf32>
    %483 = arith.mulf %383, %482 : vector<1x128xf32>
    %484 = arith.addf %480, %483 : vector<1x128xf32>
    %c109 = arith.constant 109 : index
    %485 = memref.load %arg1[%c109] : memref<112xf32, #tpu.memory_space<smem>>
    %486 = vector.broadcast %485 : f32 to vector<1x128xf32>
    %487 = arith.mulf %426, %486 : vector<1x128xf32>
    %488 = arith.addf %484, %487 : vector<1x128xf32>
    %c110 = arith.constant 110 : index
    %489 = memref.load %arg1[%c110] : memref<112xf32, #tpu.memory_space<smem>>
    %490 = vector.broadcast %489 : f32 to vector<1x128xf32>
    %491 = arith.mulf %469, %490 : vector<1x128xf32>
    %492 = arith.addf %488, %491 : vector<1x128xf32>
    %c111 = arith.constant 111 : index
    %493 = memref.load %arg1[%c111] : memref<112xf32, #tpu.memory_space<smem>>
    %494 = vector.broadcast %493 : f32 to vector<1x128xf32>
    %495 = arith.addf %492, %494 : vector<1x128xf32>
    %496 = arith.negf %495 : vector<1x128xf32>
    %497 = math.exp %496 : vector<1x128xf32>
    %cst_16 = arith.constant 1.000000e+00 : f32
    %498 = vector.broadcast %cst_16 : f32 to vector<1x128xf32>
    %499 = arith.addf %498, %497 : vector<1x128xf32>
    %500 = arith.divf %498, %499 : vector<1x128xf32>
    %c0_17 = arith.constant 0 : index
    %c0_18 = arith.constant 0 : index
    %501 = vector.load %arg3[%c0_17, %c0_18] : memref<1x128xf32, #tpu.memory_space<vmem>>, vector<1x128xf32>
    tpu.vector_store %arg3[%c0_17, %c0_18], %500 {strides = array<i32>} : memref<1x128xf32, #tpu.memory_space<vmem>>, vector<1x128xf32>,
    return
  }
  func.func @transform_0(%arg0: i32) -> i32 {
    %c0_i32 = arith.constant 0 : i32
    %c0_i32_0 = arith.constant 0 : i32
    return %c0_i32 : i32
  }
  func.func @transform_1(%arg0: i32) -> (i32, i32) {
    %c0_i32 = arith.constant 0 : i32
    %c0_i32_0 = arith.constant 0 : i32
    return %c0_i32, %arg0 : i32, i32
  }
  func.func @transform_2(%arg0: i32) -> (i32, i32) {
    %c0_i32 = arith.constant 0 : i32
    %c0_i32_0 = arith.constant 0 : i32
    return %c0_i32, %arg0 : i32, i32
  }
}

</mosaic_0001>

<llo_original>
// kernel: tpu_custom_call.1
$region0: #{tpu_custom_call.1}
  #allocation0 [shape = 'u32[]', space=smem, size = 0x4, offset = 0x4, fixed_abs, tag = 'smem constant byte address 0x4 - core index']
  #allocation1 [shape = 'u32[144,128]{1,0:T(1,128)}', space=vmem, size = 0x12000, scoped, tag = 'internal scratch']
  %s0 = inlined_call_operand.hbm [shape: f32[112], index: 0, kind: input, shape index: {}]
  %s1 = inlined_call_operand.hbm [shape: f32[4,128], index: 1, kind: input, shape index: {}]
  %s2 = inlined_call_operand.hbm [shape: f32[1,128], index: 2, kind: output, shape index: {}]
  %s3 = sld [smem:[#allocation0]]
  $region26: #{tpu_custom_call.1} parent=0
    _
  %s5 = ssub.s32 1, %s3
  %s6 = scalar_select 0, %s5, %s3
  $region1: #{tpu_custom_call.1} parent=0
    #allocation2 [shape = 'u8[512]{0}', space=smem, size = 0x200, scoped, tag = 'input window, operand 0, single buffered']
    #allocation3 [shape = 's32[1]{0}', space=sflag, size = 0x4, scoped, tag = 'scoped memory for tpu_custom_call.1']
    #allocation4 [shape = 's32[1]{0}', space=sflag, size = 0x4, scoped, tag = 'scoped memory for tpu_custom_call.1']
    #allocation5 [shape = 's32[1]{0}', space=sflag, size = 0x4, scoped, tag = 'scoped memory for tpu_custom_call.1']
    #allocation6 [shape = 'u8[2048]{0}', space=vmem, size = 0x800, scoped, tag = 'input window, operand 1, single buffered']
    #allocation7 [shape = 'u8[512]{0}', space=vmem, size = 0x400, scoped, tag = 'output window, operand 0, single buffered']
    %7 = vsyncpa [#allocation5], 0
    %8 = vsyncpa [#allocation3], 0
    %9 = vsyncpa [#allocation4], 0
    // Predicated region
    $region2: #{tpu_custom_call.1} parent=1 // pred_check
      _
    $region3: #{tpu_custom_call.1} parent=1 // pred_check_branch
      %11 = sbr.rel (0) target = $region5
    $region4: #{tpu_custom_call.1} parent=1 // pred_region
      %s13 = ssub.s32 16, 16
      %14 = vsyncadd [#allocation5], %s13
      %17 = dma.hbm_to_smem %s0, 16, [#allocation2], [#allocation5]
    $region5: #{tpu_custom_call.1} parent=1 // pred_fallthru
      _
    // Predicated region
    $region6: #{tpu_custom_call.1} parent=1 // pred_check
      _
    $region7: #{tpu_custom_call.1} parent=1 // pred_check_branch
      %19 = sbr.rel (0) target = $region9
    $region8: #{tpu_custom_call.1} parent=1 // pred_region
      %s21 = ssub.s32 64, 64
      %22 = vsyncadd [#allocation3], %s21
      %s24 = sshll.u32 [#allocation6], 4
      %s25 = int_to_ptr.vmem [resolvable:$true] %s24
      %27 = dma.hbm_to_vmem [thread:$0]  %s1, 64, %s25, [#allocation3]
    $region9: #{tpu_custom_call.1} parent=1 // pred_fallthru
      _
    // Predicated region
    $region10: #{tpu_custom_call.1} parent=1 // pred_check
      _
    $region11: #{tpu_custom_call.1} parent=1 // pred_check_branch
      %29 = sbr.rel (0) target = $region13
    $region12: #{tpu_custom_call.1} parent=1 // pred_region
      %30 = dma.done [#allocation5], 16
    $region13: #{tpu_custom_call.1} parent=1 // pred_fallthru
      _
    // Predicated region
    $region14: #{tpu_custom_call.1} parent=1 // pred_check
      _
    $region15: #{tpu_custom_call.1} parent=1 // pred_check_branch
      %32 = sbr.rel (0) target = $region17
    $region16: #{tpu_custom_call.1} parent=1 // pred_region
      %33 = dma.done [#allocation3], 64
    $region17: #{tpu_custom_call.1} parent=1 // pred_fallthru
      _
    %34 = sfence
    %v35 = vld [vmem:[#allocation6] sm:$0xf]
    %s36 = sld [smem:[#allocation2]]
    %v37 = vstv %s36
    %v38 = vmul.f32 %v35, %v37
    %s39 = sld [smem:[#allocation2 + $0x9]]
    %v40 = vstv %s39
    %v41 = vmul.f32 %v35, %v40
    %v43 = vrot.slane %v41, 1
    %v45 = vadd.f32 %v38, %v43
    %s46 = sld [smem:[#allocation2 + $0x12]]
    %v47 = vstv %s46
    %v48 = vmul.f32 %v35, %v47
    %v50 = vrot.slane %v48, 2
    %v52 = vadd.f32 %v45, %v50
    %s53 = sld [smem:[#allocation2 + $0x1b]]
    %v54 = vstv %s53
    %v55 = vmul.f32 %v35, %v54
    %v57 = vrot.slane %v55, 3
    %v59 = vadd.f32 %v52, %v57
    %s60 = sld [smem:[#allocation2 + $0x24]]
    %v61 = vstv %s60
    %v62 = vadd.f32 %v59, %v61
    %v63 = vxor.u32 %v62, 2147483648
    %v64 = vmul.f32 %v63, 1.442695
    %v65 = vpow.pop %v64
    %v66 = vadd.f32 %v65, 1.0
    %v67 = vrcp.pop %v66
    %v68 = vmul.f32 1.0, %v67
    %s69 = sld [smem:[#allocation2 + $0x1]]
    %v70 = vstv %s69
    %v71 = vmul.f32 %v35, %v70
    %s72 = sld [smem:[#allocation2 + $0xa]]
    %v73 = vstv %s72
    %v74 = vmul.f32 %v35, %v73
    %v76 = vrot.slane %v74, 1
    %v78 = vadd.f32 %v71, %v76
    %s79 = sld [smem:[#allocation2 + $0x13]]
    %v80 = vstv %s79
    %v81 = vmul.f32 %v35, %v80
    %v83 = vrot.slane %v81, 2
    %v85 = vadd.f32 %v78, %v83
    %s86 = sld [smem:[#allocation2 + $0x1c]]
    %v87 = vstv %s86
    %v88 = vmul.f32 %v35, %v87
    %v90 = vrot.slane %v88, 3
    %v92 = vadd.f32 %v85, %v90
    %s93 = sld [smem:[#allocation2 + $0x25]]
    %v94 = vstv %s93
    %v95 = vadd.f32 %v92, %v94
    %v96 = vxor.u32 %v95, 2147483648
    %v97 = vmul.f32 %v96, 1.442695
    %v98 = vpow.pop %v97
    %v99 = vadd.f32 %v98, 1.0
    %v100 = vrcp.pop %v99
    %v101 = vmul.f32 1.0, %v100
    %s102 = sld [smem:[#allocation2 + $0x2]]
    %v103 = vstv %s102
    %v104 = vmul.f32 %v35, %v103
    %s105 = sld [smem:[#allocation2 + $0xb]]
    %v106 = vstv %s105
    %v107 = vmul.f32 %v35, %v106
    %v109 = vrot.slane %v107, 1
    %v111 = vadd.f32 %v104, %v109
    %s112 = sld [smem:[#allocation2 + $0x14]]
    %v113 = vstv %s112
    %v114 = vmul.f32 %v35, %v113
    %v116 = vrot.slane %v114, 2
    %v118 = vadd.f32 %v111, %v116
    %s119 = sld [smem:[#allocation2 + $0x1d]]
    %v120 = vstv %s119
    %v121 = vmul.f32 %v35, %v120
    %v123 = vrot.slane %v121, 3
    %v125 = vadd.f32 %v118, %v123
    %s126 = sld [smem:[#allocation2 + $0x26]]
    %v127 = vstv %s126
    %v128 = vadd.f32 %v125, %v127
    %v129 = vxor.u32 %v128, 2147483648
    %v130 = vmul.f32 %v129, 1.442695
    %v131 = vpow.pop %v130
    %v132 = vadd.f32 %v131, 1.0
    %v133 = vrcp.pop %v132
    %v134 = vmul.f32 1.0, %v133
    %s135 = sld [smem:[#allocation2 + $0x3]]
    %v136 = vstv %s135
    %v137 = vmul.f32 %v35, %v136
    %s138 = sld [smem:[#allocation2 + $0xc]]
    %v139 = vstv %s138
    %v140 = vmul.f32 %v35, %v139
    %v142 = vrot.slane %v140, 1
    %v144 = vadd.f32 %v137, %v142
    %s145 = sld [smem:[#allocation2 + $0x15]]
    %v146 = vstv %s145
    %v147 = vmul.f32 %v35, %v146
    %v149 = vrot.slane %v147, 2
    %v151 = vadd.f32 %v144, %v149
    %s152 = sld [smem:[#allocation2 + $0x1e]]
    %v153 = vstv %s152
    %v154 = vmul.f32 %v35, %v153
    %v156 = vrot.slane %v154, 3
    %v158 = vadd.f32 %v151, %v156
    %s159 = sld [smem:[#allocation2 + $0x27]]
    %v160 = vstv %s159
    %v161 = vadd.f32 %v158, %v160
    %v162 = vxor.u32 %v161, 2147483648
    %v163 = vmul.f32 %v162, 1.442695
    %v164 = vpow.pop %v163
    %v165 = vadd.f32 %v164, 1.0
    %v166 = vrcp.pop %v165
    %v167 = vmul.f32 1.0, %v166
    %s168 = sld [smem:[#allocation2 + $0x4]]
    %v169 = vstv %s168
    %v170 = vmul.f32 %v35, %v169
    %s171 = sld [smem:[#allocation2 + $0xd]]
    %v172 = vstv %s171
    %v173 = vmul.f32 %v35, %v172
    %v175 = vrot.slane %v173, 1
    %v177 = vadd.f32 %v170, %v175
    %s178 = sld [smem:[#allocation2 + $0x16]]
    %v179 = vstv %s178
    %v180 = vmul.f32 %v35, %v179
    %v182 = vrot.slane %v180, 2
    %v184 = vadd.f32 %v177, %v182
    %s185 = sld [smem:[#allocation2 + $0x1f]]
    %v186 = vstv %s185
    %v187 = vmul.f32 %v35, %v186
    %v189 = vrot.slane %v187, 3
    %v191 = vadd.f32 %v184, %v189
    %s192 = sld [smem:[#allocation2 + $0x28]]
    %v193 = vstv %s192
    %v194 = vadd.f32 %v191, %v193
    %v195 = vxor.u32 %v194, 2147483648
    %v196 = vmul.f32 %v195, 1.442695
    %v197 = vpow.pop %v196
    %v198 = vadd.f32 %v197, 1.0
    %v199 = vrcp.pop %v198
    %v200 = vmul.f32 1.0, %v199
    %s201 = sld [smem:[#allocation2 + $0x5]]
    %v202 = vstv %s201
    %v203 = vmul.f32 %v35, %v202
    %s204 = sld [smem:[#allocation2 + $0xe]]
    %v205 = vstv %s204
    %v206 = vmul.f32 %v35, %v205
    %v208 = vrot.slane %v206, 1
    %v210 = vadd.f32 %v203, %v208
    %s211 = sld [smem:[#allocation2 + $0x17]]
    %v212 = vstv %s211
    %v213 = vmul.f32 %v35, %v212
    %v215 = vrot.slane %v213, 2
    %v217 = vadd.f32 %v210, %v215
    %s218 = sld [smem:[#allocation2 + $0x20]]
    %v219 = vstv %s218
    %v220 = vmul.f32 %v35, %v219
    %v222 = vrot.slane %v220, 3
    %v224 = vadd.f32 %v217, %v222
    %s225 = sld [smem:[#allocation2 + $0x29]]
    %v226 = vstv %s225
    %v227 = vadd.f32 %v224, %v226
    %v228 = vxor.u32 %v227, 2147483648
    %v229 = vmul.f32 %v228, 1.442695
    %v230 = vpow.pop %v229
    %v231 = vadd.f32 %v230, 1.0
    %v232 = vrcp.pop %v231
    %v233 = vmul.f32 1.0, %v232
    %s234 = sld [smem:[#allocation2 + $0x6]]
    %v235 = vstv %s234
    %v236 = vmul.f32 %v35, %v235
    %s237 = sld [smem:[#allocation2 + $0xf]]
    %v238 = vstv %s237
    %v239 = vmul.f32 %v35, %v238
    %v241 = vrot.slane %v239, 1
    %v243 = vadd.f32 %v236, %v241
    %s244 = sld [smem:[#allocation2 + $0x18]]
    %v245 = vstv %s244
    %v246 = vmul.f32 %v35, %v245
    %v248 = vrot.slane %v246, 2
    %v250 = vadd.f32 %v243, %v248
    %s251 = sld [smem:[#allocation2 + $0x21]]
    %v252 = vstv %s251
    %v253 = vmul.f32 %v35, %v252
    %v255 = vrot.slane %v253, 3
    %v257 = vadd.f32 %v250, %v255
    %s258 = sld [smem:[#allocation2 + $0x2a]]
    %v259 = vstv %s258
    %v260 = vadd.f32 %v257, %v259
    %v261 = vxor.u32 %v260, 2147483648
    %v262 = vmul.f32 %v261, 1.442695
    %v263 = vpow.pop %v262
    %v264 = vadd.f32 %v263, 1.0
    %v265 = vrcp.pop %v264
    %v266 = vmul.f32 1.0, %v265
    %s267 = sld [smem:[#allocation2 + $0x7]]
    %v268 = vstv %s267
    %v269 = vmul.f32 %v35, %v268
    %s270 = sld [smem:[#allocation2 + $0x10]]
    %v271 = vstv %s270
    %v272 = vmul.f32 %v35, %v271
    %v274 = vrot.slane %v272, 1
    %v276 = vadd.f32 %v269, %v274
    %s277 = sld [smem:[#allocation2 + $0x19]]
    %v278 = vstv %s277
    %v279 = vmul.f32 %v35, %v278
    %v281 = vrot.slane %v279, 2
    %v283 = vadd.f32 %v276, %v281
    %s284 = sld [smem:[#allocation2 + $0x22]]
    %v285 = vstv %s284
    %v286 = vmul.f32 %v35, %v285
    %v288 = vrot.slane %v286, 3
    %v290 = vadd.f32 %v283, %v288
    %s291 = sld [smem:[#allocation2 + $0x2b]]
    %v292 = vstv %s291
    %v293 = vadd.f32 %v290, %v292
    %v294 = vxor.u32 %v293, 2147483648
    %v295 = vmul.f32 %v294, 1.442695
    %v296 = vpow.pop %v295
    %v297 = vadd.f32 %v296, 1.0
    %v298 = vrcp.pop %v297
    %v299 = vmul.f32 1.0, %v298
    %s300 = sld [smem:[#allocation2 + $0x8]]
    %v301 = vstv %s300
    %v302 = vmul.f32 %v35, %v301
    %s303 = sld [smem:[#allocation2 + $0x11]]
    %v304 = vstv %s303
    %v305 = vmul.f32 %v35, %v304
    %v307 = vrot.slane %v305, 1
    %v309 = vadd.f32 %v302, %v307
    %s310 = sld [smem:[#allocation2 + $0x1a]]
    %v311 = vstv %s310
    %v312 = vmul.f32 %v35, %v311
    %v314 = vrot.slane %v312, 2
    %v316 = vadd.f32 %v309, %v314
    %s317 = sld [smem:[#allocation2 + $0x23]]
    %v318 = vstv %s317
    %v319 = vmul.f32 %v35, %v318
    %v321 = vrot.slane %v319, 3
    %v323 = vadd.f32 %v316, %v321
    %s324 = sld [smem:[#allocation2 + $0x2c]]
    %v325 = vstv %s324
    %v326 = vadd.f32 %v323, %v325
    %v327 = vxor.u32 %v326, 2147483648
    %v328 = vmul.f32 %v327, 1.442695
    %v329 = vpow.pop %v328
    %v330 = vadd.f32 %v329, 1.0
    %v331 = vrcp.pop %v330
    %v332 = vmul.f32 1.0, %v331
    %s333 = sld [smem:[#allocation2 + $0x2d]]
    %v334 = vstv %s333
    %v335 = vmul.f32 %v68, %v334
    %s336 = sld [smem:[#allocation2 + $0x33]]
    %v337 = vstv %s336
    %v338 = vmul.f32 %v101, %v337
    %v339 = vadd.f32 %v335, %v338
    %s340 = sld [smem:[#allocation2 + $0x39]]
    %v341 = vstv %s340
    %v342 = vmul.f32 %v134, %v341
    %v343 = vadd.f32 %v339, %v342
    %s344 = sld [smem:[#allocation2 + $0x3f]]
    %v345 = vstv %s344
    %v346 = vmul.f32 %v167, %v345
    %v347 = vadd.f32 %v343, %v346
    %s348 = sld [smem:[#allocation2 + $0x45]]
    %v349 = vstv %s348
    %v350 = vmul.f32 %v200, %v349
    %v351 = vadd.f32 %v347, %v350
    %s352 = sld [smem:[#allocation2 + $0x4b]]
    %v353 = vstv %s352
    %v354 = vmul.f32 %v233, %v353
    %v355 = vadd.f32 %v351, %v354
    %s356 = sld [smem:[#allocation2 + $0x51]]
    %v357 = vstv %s356
    %v358 = vmul.f32 %v266, %v357
    %v359 = vadd.f32 %v355, %v358
    %s360 = sld [smem:[#allocation2 + $0x57]]
    %v361 = vstv %s360
    %v362 = vmul.f32 %v299, %v361
    %v363 = vadd.f32 %v359, %v362
    %s364 = sld [smem:[#allocation2 + $0x5d]]
    %v365 = vstv %s364
    %v366 = vmul.f32 %v332, %v365
    %v367 = vadd.f32 %v363, %v366
    %s368 = sld [smem:[#allocation2 + $0x63]]
    %v369 = vstv %s368
    %v370 = vadd.f32 %v367, %v369
    %v371 = vxor.u32 %v370, 2147483648
    %v372 = vmul.f32 %v371, 1.442695
    %v373 = vpow.pop %v372
    %v374 = vadd.f32 %v373, 1.0
    %v375 = vrcp.pop %v374
    %v376 = vmul.f32 1.0, %v375
    %s377 = sld [smem:[#allocation2 + $0x2e]]
    %v378 = vstv %s377
    %v379 = vmul.f32 %v68, %v378
    %s380 = sld [smem:[#allocation2 + $0x34]]
    %v381 = vstv %s380
    %v382 = vmul.f32 %v101, %v381
    %v383 = vadd.f32 %v379, %v382
    %s384 = sld [smem:[#allocation2 + $0x3a]]
    %v385 = vstv %s384
    %v386 = vmul.f32 %v134, %v385
    %v387 = vadd.f32 %v383, %v386
    %s388 = sld [smem:[#allocation2 + $0x40]]
    %v389 = vstv %s388
    %v390 = vmul.f32 %v167, %v389
    %v391 = vadd.f32 %v387, %v390
    %s392 = sld [smem:[#allocation2 + $0x46]]
    %v393 = vstv %s392
    %v394 = vmul.f32 %v200, %v393
    %v395 = vadd.f32 %v391, %v394
    %s396 = sld [smem:[#allocation2 + $0x4c]]
    %v397 = vstv %s396
    %v398 = vmul.f32 %v233, %v397
    %v399 = vadd.f32 %v395, %v398
    %s400 = sld [smem:[#allocation2 + $0x52]]
    %v401 = vstv %s400
    %v402 = vmul.f32 %v266, %v401
    %v403 = vadd.f32 %v399, %v402
    %s404 = sld [smem:[#allocation2 + $0x58]]
    %v405 = vstv %s404
    %v406 = vmul.f32 %v299, %v405
    %v407 = vadd.f32 %v403, %v406
    %s408 = sld [smem:[#allocation2 + $0x5e]]
    %v409 = vstv %s408
    %v410 = vmul.f32 %v332, %v409
    %v411 = vadd.f32 %v407, %v410
    %s412 = sld [smem:[#allocation2 + $0x64]]
    %v413 = vstv %s412
    %v414 = vadd.f32 %v411, %v413
    %v415 = vxor.u32 %v414, 2147483648
    %v416 = vmul.f32 %v415, 1.442695
    %v417 = vpow.pop %v416
    %v418 = vadd.f32 %v417, 1.0
    %v419 = vrcp.pop %v418
    %v420 = vmul.f32 1.0, %v419
    %s421 = sld [smem:[#allocation2 + $0x2f]]
    %v422 = vstv %s421
    %v423 = vmul.f32 %v68, %v422
    %s424 = sld [smem:[#allocation2 + $0x35]]
    %v425 = vstv %s424
    %v426 = vmul.f32 %v101, %v425
    %v427 = vadd.f32 %v423, %v426
    %s428 = sld [smem:[#allocation2 + $0x3b]]
    %v429 = vstv %s428
    %v430 = vmul.f32 %v134, %v429
    %v431 = vadd.f32 %v427, %v430
    %s432 = sld [smem:[#allocation2 + $0x41]]
    %v433 = vstv %s432
    %v434 = vmul.f32 %v167, %v433
    %v435 = vadd.f32 %v431, %v434
    %s436 = sld [smem:[#allocation2 + $0x47]]
    %v437 = vstv %s436
    %v438 = vmul.f32 %v200, %v437
    %v439 = vadd.f32 %v435, %v438
    %s440 = sld [smem:[#allocation2 + $0x4d]]
    %v441 = vstv %s440
    %v442 = vmul.f32 %v233, %v441
    %v443 = vadd.f32 %v439, %v442
    %s444 = sld [smem:[#allocation2 + $0x53]]
    %v445 = vstv %s444
    %v446 = vmul.f32 %v266, %v445
    %v447 = vadd.f32 %v443, %v446
    %s448 = sld [smem:[#allocation2 + $0x59]]
    %v449 = vstv %s448
    %v450 = vmul.f32 %v299, %v449
    %v451 = vadd.f32 %v447, %v450
    %s452 = sld [smem:[#allocation2 + $0x5f]]
    %v453 = vstv %s452
    %v454 = vmul.f32 %v332, %v453
    %v455 = vadd.f32 %v451, %v454
    %s456 = sld [smem:[#allocation2 + $0x65]]
    %v457 = vstv %s456
    %v458 = vadd.f32 %v455, %v457
    %v459 = vxor.u32 %v458, 2147483648
    %v460 = vmul.f32 %v459, 1.442695
    %v461 = vpow.pop %v460
    %v462 = vadd.f32 %v461, 1.0
    %v463 = vrcp.pop %v462
    %v464 = vmul.f32 1.0, %v463
    %s465 = sld [smem:[#allocation2 + $0x30]]
    %v466 = vstv %s465
    %v467 = vmul.f32 %v68, %v466
    %s468 = sld [smem:[#allocation2 + $0x36]]
    %v469 = vstv %s468
    %v470 = vmul.f32 %v101, %v469
    %v471 = vadd.f32 %v467, %v470
    %s472 = sld [smem:[#allocation2 + $0x3c]]
    %v473 = vstv %s472
    %v474 = vmul.f32 %v134, %v473
    %v475 = vadd.f32 %v471, %v474
    %s476 = sld [smem:[#allocation2 + $0x42]]
    %v477 = vstv %s476
    %v478 = vmul.f32 %v167, %v477
    %v479 = vadd.f32 %v475, %v478
    %s480 = sld [smem:[#allocation2 + $0x48]]
    %v481 = vstv %s480
    %v482 = vmul.f32 %v200, %v481
    %v483 = vadd.f32 %v479, %v482
    %s484 = sld [smem:[#allocation2 + $0x4e]]
    %v485 = vstv %s484
    %v486 = vmul.f32 %v233, %v485
    %v487 = vadd.f32 %v483, %v486
    %s488 = sld [smem:[#allocation2 + $0x54]]
    %v489 = vstv %s488
    %v490 = vmul.f32 %v266, %v489
    %v491 = vadd.f32 %v487, %v490
    %s492 = sld [smem:[#allocation2 + $0x5a]]
    %v493 = vstv %s492
    %v494 = vmul.f32 %v299, %v493
    %v495 = vadd.f32 %v491, %v494
    %s496 = sld [smem:[#allocation2 + $0x60]]
    %v497 = vstv %s496
    %v498 = vmul.f32 %v332, %v497
    %v499 = vadd.f32 %v495, %v498
    %s500 = sld [smem:[#allocation2 + $0x66]]
    %v501 = vstv %s500
    %v502 = vadd.f32 %v499, %v501
    %v503 = vxor.u32 %v502, 2147483648
    %v504 = vmul.f32 %v503, 1.442695
    %v505 = vpow.pop %v504
    %v506 = vadd.f32 %v505, 1.0
    %v507 = vrcp.pop %v506
    %v508 = vmul.f32 1.0, %v507
    %s509 = sld [smem:[#allocation2 + $0x31]]
    %v510 = vstv %s509
    %v511 = vmul.f32 %v68, %v510
    %s512 = sld [smem:[#allocation2 + $0x37]]
    %v513 = vstv %s512
    %v514 = vmul.f32 %v101, %v513
    %v515 = vadd.f32 %v511, %v514
    %s516 = sld [smem:[#allocation2 + $0x3d]]
    %v517 = vstv %s516
    %v518 = vmul.f32 %v134, %v517
    %v519 = vadd.f32 %v515, %v518
    %s520 = sld [smem:[#allocation2 + $0x43]]
    %v521 = vstv %s520
    %v522 = vmul.f32 %v167, %v521
    %v523 = vadd.f32 %v519, %v522
    %s524 = sld [smem:[#allocation2 + $0x49]]
    %v525 = vstv %s524
    %v526 = vmul.f32 %v200, %v525
    %v527 = vadd.f32 %v523, %v526
    %s528 = sld [smem:[#allocation2 + $0x4f]]
    %v529 = vstv %s528
    %v530 = vmul.f32 %v233, %v529
    %v531 = vadd.f32 %v527, %v530
    %s532 = sld [smem:[#allocation2 + $0x55]]
    %v533 = vstv %s532
    %v534 = vmul.f32 %v266, %v533
    %v535 = vadd.f32 %v531, %v534
    %s536 = sld [smem:[#allocation2 + $0x5b]]
    %v537 = vstv %s536
    %v538 = vmul.f32 %v299, %v537
    %v539 = vadd.f32 %v535, %v538
    %s540 = sld [smem:[#allocation2 + $0x61]]
    %v541 = vstv %s540
    %v542 = vmul.f32 %v332, %v541
    %v543 = vadd.f32 %v539, %v542
    %s544 = sld [smem:[#allocation2 + $0x67]]
    %v545 = vstv %s544
    %v546 = vadd.f32 %v543, %v545
    %v547 = vxor.u32 %v546, 2147483648
    %v548 = vmul.f32 %v547, 1.442695
    %v549 = vpow.pop %v548
    %v550 = vadd.f32 %v549, 1.0
    %v551 = vrcp.pop %v550
    %v552 = vmul.f32 1.0, %v551
    %s553 = sld [smem:[#allocation2 + $0x32]]
    %v554 = vstv %s553
    %v555 = vmul.f32 %v68, %v554
    %s556 = sld [smem:[#allocation2 + $0x38]]
    %v557 = vstv %s556
    %v558 = vmul.f32 %v101, %v557
    %v559 = vadd.f32 %v555, %v558
    %s560 = sld [smem:[#allocation2 + $0x3e]]
    %v561 = vstv %s560
    %v562 = vmul.f32 %v134, %v561
    %v563 = vadd.f32 %v559, %v562
    %s564 = sld [smem:[#allocation2 + $0x44]]
    %v565 = vstv %s564
    %v566 = vmul.f32 %v167, %v565
    %v567 = vadd.f32 %v563, %v566
    %s568 = sld [smem:[#allocation2 + $0x4a]]
    %v569 = vstv %s568
    %v570 = vmul.f32 %v200, %v569
    %v571 = vadd.f32 %v567, %v570
    %s572 = sld [smem:[#allocation2 + $0x50]]
    %v573 = vstv %s572
    %v574 = vmul.f32 %v233, %v573
    %v575 = vadd.f32 %v571, %v574
    %s576 = sld [smem:[#allocation2 + $0x56]]
    %v577 = vstv %s576
    %v578 = vmul.f32 %v266, %v577
    %v579 = vadd.f32 %v575, %v578
    %s580 = sld [smem:[#allocation2 + $0x5c]]
    %v581 = vstv %s580
    %v582 = vmul.f32 %v299, %v581
    %v583 = vadd.f32 %v579, %v582
    %s584 = sld [smem:[#allocation2 + $0x62]]
    %v585 = vstv %s584
    %v586 = vmul.f32 %v332, %v585
    %v587 = vadd.f32 %v583, %v586
    %s588 = sld [smem:[#allocation2 + $0x68]]
    %v589 = vstv %s588
    %v590 = vadd.f32 %v587, %v589
    %v591 = vxor.u32 %v590, 2147483648
    %v592 = vmul.f32 %v591, 1.442695
    %v593 = vpow.pop %v592
    %v594 = vadd.f32 %v593, 1.0
    %v595 = vrcp.pop %v594
    %v596 = vmul.f32 1.0, %v595
    %s597 = sld [smem:[#allocation2 + $0x69]]
    %v598 = vstv %s597
    %v599 = vmul.f32 %v376, %v598
    %s600 = sld [smem:[#allocation2 + $0x6a]]
    %v601 = vstv %s600
    %v602 = vmul.f32 %v420, %v601
    %v603 = vadd.f32 %v599, %v602
    %s604 = sld [smem:[#allocation2 + $0x6b]]
    %v605 = vstv %s604
    %v606 = vmul.f32 %v464, %v605
    %v607 = vadd.f32 %v603, %v606
    %s608 = sld [smem:[#allocation2 + $0x6c]]
    %v609 = vstv %s608
    %v610 = vmul.f32 %v508, %v609
    %v611 = vadd.f32 %v607, %v610
    %s612 = sld [smem:[#allocation2 + $0x6d]]
    %v613 = vstv %s612
    %v614 = vmul.f32 %v552, %v613
    %v615 = vadd.f32 %v611, %v614
    %s616 = sld [smem:[#allocation2 + $0x6e]]
    %v617 = vstv %s616
    %v618 = vmul.f32 %v596, %v617
    %v619 = vadd.f32 %v615, %v618
    %s620 = sld [smem:[#allocation2 + $0x6f]]
    %v621 = vstv %s620
    %v622 = vadd.f32 %v619, %v621
    %v623 = vxor.u32 %v622, 2147483648
    %v624 = vmul.f32 %v623, 1.442695
    %v625 = vpow.pop %v624
    %v626 = vadd.f32 %v625, 1.0
    %v627 = vrcp.pop %v626
    %v628 = vmul.f32 1.0, %v627
    %629 = vst [vmem:[#allocation7] sm:$0x1] %v628
    // Predicated region
    $region18: #{tpu_custom_call.1} parent=1 // pred_check
      _
    $region19: #{tpu_custom_call.1} parent=1 // pred_check_branch
      %631 = sbr.rel (0) target = $region21
    $region20: #{tpu_custom_call.1} parent=1 // pred_region
      %s633 = ssub.s32 16, 16
      %634 = vsyncadd [#allocation4], %s633
      %s636 = sshll.u32 [#allocation7], 4
      %s637 = int_to_ptr.vmem [resolvable:$true] %s636
      %639 = dma.vmem_to_hbm [thread:$0]  %s637, 16, %s2, [#allocation4]
    $region21: #{tpu_custom_call.1} parent=1 // pred_fallthru
      _
    // Predicated region
    $region22: #{tpu_custom_call.1} parent=1 // pred_check
      _
    $region23: #{tpu_custom_call.1} parent=1 // pred_check_branch
      %641 = sbr.rel (0) target = $region25
    $region24: #{tpu_custom_call.1} parent=1 // pred_region
      %642 = dma.done [#allocation4], 16
    $region25: #{tpu_custom_call.1} parent=1 // pred_fallthru
      _
    %643 = vsyncpa [#allocation3], 1
    %644 = vsyncpa [#allocation4], 1
    %645 = vsyncpa [#allocation5], 1

</llo_original>
